<compile_context>
chip_gen: v7x
topology: tpu7x:2x2x1
jax: 0.10.0
libtpu: 0.0.40
codegen_flags: <defaults>
</compile_context>

<pallas_src>
import functools

import jax
import jax.numpy as jnp
from jax.experimental import pallas as pl
from jax.experimental.pallas import tpu as pltpu


# ----------------------------------------------------------------------------
# helpers
# ----------------------------------------------------------------------------
def _pick_row_tile(m, target=512):
    """Row tile: multiple of 8, divides m, <= target, and leaves >= 2 grid
    steps when m allows it (so both TensorCores get work)."""
    if m % 8 != 0:
        return m                       # tiny/odd sizes: single full block
    cap = min(target, m if m <= 8 else m // 2)
    tm = max(8, (cap // 8) * 8)
    while m % tm != 0:
        tm -= 8
    return max(tm, 8)


def _layer_norm(y, g, b, eps=1e-5):
    mu = jnp.mean(y, axis=-1, keepdims=True)
    var = jnp.mean(jnp.square(y - mu), axis=-1, keepdims=True)
    return (y - mu) * jax.lax.rsqrt(var + eps) * g + b


def _rel_shift_in_vmem(bd):
    """Exact Transformer-XL `_rel_shift` of one (Q, R) score block, in VMEM.

    torch semantics: concat([zeros(Q,1), bd], -1).flatten()[Q:] viewed as (Q,R)
    (row i shifted left by Q-1-i, wrapping into row i+1's scores).

    Realised without HBM round-trips and without unsupported flat reshapes:
    build the row buffer [bd | 0 | bd_next_row | 0-pad] (lane-aligned), then
    rotate row i left by (Q-1-i) with a log2(Q) barrel shifter made of static
    lane slices + selects.
    """
    q, r = bd.shape
    if q == 1:
        return bd
    # next-row copy; the wrapped last row is never read (row Q-1 has shift 0)
    bd_next = jnp.concatenate([bd[1:, :], bd[:1, :]], axis=0)
    width = 2 * r + 1
    wp = ((width + 127) // 128) * 128          # lane-align the shift buffer
    pieces = [bd, jnp.zeros((q, 1), bd.dtype), bd_next]
    if wp > width:
        pieces.append(jnp.zeros((q, wp - width), bd.dtype))
    buf = jnp.concatenate(pieces, axis=-1)     # (Q, wp)
    shift = (q - 1) - jax.lax.broadcasted_iota(jnp.int32, (q, wp), 0)
    v = 1
    while v < q:
        rolled = jnp.concatenate([buf[:, v:], buf[:, :v]], axis=-1)  # rot-left v
        buf = jnp.where((shift & v) != 0, rolled, buf)
        v *= 2
    return buf[:, :r]


# ----------------------------------------------------------------------------
# r projection: rk = r @ r_w  (row-tiled dense, bf16 output for the MXU)
# ----------------------------------------------------------------------------
def _rproj_kernel(r_ref, w_ref, o_ref):
    o_ref[...] = jnp.dot(r_ref[...].astype(jnp.bfloat16), w_ref[...],
                         preferred_element_type=jnp.float32).astype(o_ref.dtype)


def rproj(r, r_w_bf16):
    R, D = r.shape
    N = r_w_bf16.shape[1]
    tr = _pick_row_tile(R)
    return pl.pallas_call(
        _rproj_kernel,
        out_shape=jax.ShapeDtypeStruct((R, N), jnp.bfloat16),
        grid=(R // tr,),
        in_specs=[
            pl.BlockSpec((tr, D), lambda i: (i, 0)),
            pl.BlockSpec((D, N), lambda i: (0, 0)),
        ],
        out_specs=pl.BlockSpec((tr, N), lambda i: (i, 0)),
        compiler_params=pltpu.CompilerParams(dimension_semantics=("parallel",)),
    )(r, r_w_bf16)


# ----------------------------------------------------------------------------
# Fused attention block per batch element:
#   QKV proj + rel-attention (in-kernel rel_shift) + O proj + residual + LN
# ----------------------------------------------------------------------------
def _attn_block_kernel(x_ref, qkvw_ref, rk_ref, rwb_ref, rrb_ref, bias_ref,
                       ow_ref, g_ref, b_ref, o_ref, *, n_head, d_head, scale):
    bf = jnp.bfloat16
    hn, dh = n_head, d_head

    x = x_ref[0]                                               # (Q, D) f32
    # fused QKV projection for this batch element (bf16 in, f32 accumulate)
    heads = jnp.dot(x.astype(bf), qkvw_ref[...],
                    preferred_element_type=jnp.float32)        # (Q, 3*H*Dh)
    rk_all = rk_ref[...]                                       # (R, H*Dh) bf16
    rwb = rwb_ref[...]                                         # (H, Dh) f32
    rrb = rrb_ref[...]                                         # (H, Dh) f32
    bias = bias_ref[...]                                       # (Q, K) f32

    outs = []
    for h in range(hn):                                        # static head loop
        q = heads[:, h * dh:(h + 1) * dh]
        k = heads[:, (hn + h) * dh:(hn + h + 1) * dh]
        v = heads[:, (2 * hn + h) * dh:(2 * hn + h + 1) * dh]
        rk = rk_all[:, h * dh:(h + 1) * dh]
        # fold 1/sqrt(Dh) into q (Q*Dh mults instead of Q*K)
        qw = ((q + rwb[h:h + 1, :]) * scale).astype(bf)
        qr = ((q + rrb[h:h + 1, :]) * scale).astype(bf)
        ac = jnp.dot(qw, k.astype(bf).T, preferred_element_type=jnp.float32)
        bd = jnp.dot(qr, rk.T, preferred_element_type=jnp.float32)
        s = ac + _rel_shift_in_vmem(bd) + bias                 # (Q, K) f32
        m = jnp.max(s, axis=-1, keepdims=True)
        e = jnp.exp(s - m)
        p = e * pl.reciprocal(jnp.sum(e, axis=-1, keepdims=True), approx=True)
        outs.append(jnp.dot(p.astype(bf), v.astype(bf),
                            preferred_element_type=jnp.float32))
    attn_vec = jnp.concatenate(outs, axis=-1)                  # (Q, H*Dh)
    attn_out = jnp.dot(attn_vec.astype(bf), ow_ref[...],
                       preferred_element_type=jnp.float32)     # (Q, D)
    # residual + LayerNorm (post-lnorm path), f32
    o_ref[0] = _layer_norm(x + attn_out, g_ref[...], b_ref[...])


def attn_block(x_bqd, qkv_w, rk, r_w_bias, r_r_bias, bias_qk, o_w, ln_g, ln_b,
               *, n_head, d_head, scale):
    B, Q, D = x_bqd.shape
    R, HD = rk.shape
    K = bias_qk.shape[1]
    kern = functools.partial(_attn_block_kernel, n_head=n_head, d_head=d_head,
                             scale=scale)
    return pl.pallas_call(
        kern,
        out_shape=jax.ShapeDtypeStruct((B, Q, D), jnp.float32),
        grid=(B,),
        in_specs=[
            pl.BlockSpec((1, Q, D), lambda b: (b, 0, 0)),
            pl.BlockSpec((D, 3 * HD), lambda b: (0, 0)),
            pl.BlockSpec((R, HD), lambda b: (0, 0)),
            pl.BlockSpec((n_head, d_head), lambda b: (0, 0)),
            pl.BlockSpec((n_head, d_head), lambda b: (0, 0)),
            pl.BlockSpec((Q, K), lambda b: (0, 0)),
            pl.BlockSpec((HD, D), lambda b: (0, 0)),
            pl.BlockSpec((1, D), lambda b: (0, 0)),
            pl.BlockSpec((1, D), lambda b: (0, 0)),
        ],
        out_specs=pl.BlockSpec((1, Q, D), lambda b: (b, 0, 0)),
        compiler_params=pltpu.CompilerParams(dimension_semantics=("parallel",)),
    )(x_bqd, qkv_w, rk, r_w_bias, r_r_bias, bias_qk, o_w,
      ln_g.reshape(1, D), ln_b.reshape(1, D))


# ----------------------------------------------------------------------------
# Fused position-wise FF + residual + LayerNorm (row-tiled)
# ----------------------------------------------------------------------------
def _ffn_block_kernel(x_ref, w1_ref, b1_ref, w2_ref, b2_ref, g_ref, b_ref, o_ref):
    bf = jnp.bfloat16
    x = x_ref[...]                                             # (tm, D) f32
    h = jnp.dot(x.astype(bf), w1_ref[...],
                preferred_element_type=jnp.float32) + b1_ref[...]
    h = jnp.maximum(h, 0.0)
    core = jnp.dot(h.astype(bf), w2_ref[...],
                   preferred_element_type=jnp.float32) + b2_ref[...]
    o_ref[...] = _layer_norm(x + core, g_ref[...], b_ref[...])


def ffn_block(x2d, w1, b1, w2, b2, g, b):
    M, D = x2d.shape
    Di = w1.shape[1]
    tm = _pick_row_tile(M)
    return pl.pallas_call(
        _ffn_block_kernel,
        out_shape=jax.ShapeDtypeStruct((M, D), jnp.float32),
        grid=(M // tm,),
        in_specs=[
            pl.BlockSpec((tm, D), lambda i: (i, 0)),
            pl.BlockSpec((D, Di), lambda i: (0, 0)),
            pl.BlockSpec((1, Di), lambda i: (0, 0)),
            pl.BlockSpec((Di, D), lambda i: (0, 0)),
            pl.BlockSpec((1, D), lambda i: (0, 0)),
            pl.BlockSpec((1, D), lambda i: (0, 0)),
            pl.BlockSpec((1, D), lambda i: (0, 0)),
        ],
        out_specs=pl.BlockSpec((tm, D), lambda i: (i, 0)),
        compiler_params=pltpu.CompilerParams(dimension_semantics=("parallel",)),
    )(x2d, w1, b1.reshape(1, Di), w2, b2.reshape(1, D),
      g.reshape(1, D), b.reshape(1, D))


# ----------------------------------------------------------------------------
# Full decoder layer forward (post-lnorm, eval/no-dropout, mems=None)
# ----------------------------------------------------------------------------
def decoder_layer(params, w, r, r_w_bias, r_r_bias, dec_attn_mask=None):
    Q, B, D = w.shape
    R = r.shape[0]
    H, Dh = r_w_bias.shape
    K = Q                                    # mems=None -> klen == qlen
    assert R == K, "fused rel-shift kernel assumes rlen == klen (mems=None)"
    scale = 1.0 / (Dh ** 0.5)

    bf = jnp.bfloat16
    qkv_w = params["qkv_w"].astype(bf)
    r_w = params["r_w"].astype(bf)
    o_w = params["o_w"].astype(bf)

    # mask bias (2-D (Q,K)); finite negative keeps softmax NaN-free
    if dec_attn_mask is not None:
        bias_qk = jnp.where(dec_attn_mask.astype(bool),
                            jnp.float32(-1e30), jnp.float32(0.0))
        # TODO(synk): 3-D per-batch attn_mask variant not wired through.
    else:
        bias_qk = jnp.zeros((Q, K), jnp.float32)

    # r projection once (shared across batch)
    rk = rproj(r, r_w)                                      # (R, H*Dh) bf16

    # fused attention block (QKV proj + rel-attn + O proj + residual + LN)
    x_bqd = jnp.transpose(w, (1, 0, 2))                     # (B, Q, D)
    attn_ln = attn_block(x_bqd, qkv_w, rk, r_w_bias, r_r_bias, bias_qk, o_w,
                         params["ln1_g"], params["ln1_b"],
                         n_head=H, d_head=Dh, scale=scale)  # (B, Q, D) f32

    # fused FFN block (row-tiled)
    out2 = ffn_block(attn_ln.reshape(B * Q, D),
                     params["ff_w1"].astype(bf), params["ff_b1"],
                     params["ff_w2"].astype(bf), params["ff_b2"],
                     params["ln2_g"], params["ln2_b"])      # (B*Q, D)

    return jnp.transpose(out2.reshape(B, Q, D), (1, 0, 2))  # (Q, B, D)


# ----------------------------------------------------------------------------
# pure-JAX f32 reference (same forward-pass semantics) for a numerics check
# ----------------------------------------------------------------------------
def reference_decoder_layer(params, w, r, r_w_bias, r_r_bias, dec_attn_mask=None):
    Q, B, D = w.shape
    R = r.shape[0]
    H, Dh = r_w_bias.shape
    scale = 1.0 / (Dh ** 0.5)
    w2d = w.reshape(Q * B, D)
    w_heads = w2d @ params["qkv_w"]
    r_head_k = r @ params["r_w"]
    heads = w_heads.reshape(Q, B, 3, H, Dh)
    q = jnp.transpose(heads[:, :, 0], (1, 2, 0, 3))
    k = jnp.transpose(heads[:, :, 1], (1, 2, 0, 3))
    v = jnp.transpose(heads[:, :, 2], (1, 2, 0, 3))
    rk = jnp.transpose(r_head_k.reshape(R, H, Dh), (1, 0, 2))
    ac = jnp.einsum('bhqd,bhkd->bhqk', q + r_w_bias[None, :, None, :], k)
    bd = jnp.einsum('bhqd,hkd->bhqk', q + r_r_bias[None, :, None, :], rk)
    zp = jnp.zeros((B, H, Q, 1), bd.dtype)
    bd = jnp.concatenate([zp, bd], axis=3).reshape(B, H, R + 1, Q)[:, :, 1:, :]
    bd = bd.reshape(B, H, Q, R)
    s = (ac + bd) * scale
    if dec_attn_mask is not None:
        s = s + jnp.where(dec_attn_mask.astype(bool), -1e30, 0.0)[None, None]
    p = jax.nn.softmax(s, axis=-1)
    av = jnp.einsum('bhqk,bhkd->bhqd', p, v)
    av = jnp.transpose(av, (2, 0, 1, 3)).reshape(Q * B, H * Dh)
    out1 = _layer_norm(av @ params["o_w"] + w2d, params["ln1_g"], params["ln1_b"])
    h = jnp.maximum(out1 @ params["ff_w1"] + params["ff_b1"], 0.0)
    core = h @ params["ff_w2"] + params["ff_b2"]
    out2 = _layer_norm(core + out1, params["ln2_g"], params["ln2_b"])
    return out2.reshape(Q, B, D)


# ----------------------------------------------------------------------------
def make_params(key, n_head, d_model, d_head, d_inner):
    ks = jax.random.split(key, 8)
    s = 0.05
    return {
        "qkv_w": s * jax.random.normal(ks[0], (d_model, 3 * n_head * d_head), jnp.float32),
        "r_w":   s * jax.random.normal(ks[1], (d_model, n_head * d_head), jnp.float32),
        "o_w":   s * jax.random.normal(ks[2], (n_head * d_head, d_model), jnp.float32),
        "ln1_g": jnp.ones((d_model,), jnp.float32),
        "ln1_b": jnp.zeros((d_model,), jnp.float32),
        "ff_w1": s * jax.random.normal(ks[3], (d_model, d_inner), jnp.float32),
        "ff_b1": s * jax.random.normal(ks[4], (d_inner,), jnp.float32),
        "ff_w2": s * jax.random.normal(ks[5], (d_inner, d_model), jnp.float32),
        "ff_b2": s * jax.random.normal(ks[6], (d_model,), jnp.float32),
        "ln2_g": jnp.ones((d_model,), jnp.float32),
        "ln2_b": jnp.zeros((d_model,), jnp.float32),
    }


if __name__ == "__main__":
    n_head, d_model, d_head, d_inner = 2, 32, 8, 64
    qlen, bsz, rlen = 8, 2, 8

    key = jax.random.PRNGKey(0)
    k1, k2, k3, k4, kp = jax.random.split(key, 5)

    dec_inp = jax.random.normal(k1, (qlen, bsz, d_model), jnp.float32)
    r = jax.random.normal(k2, (rlen, d_model), jnp.float32)
    r_w_bias = 0.1 * jax.random.normal(k3, (n_head, d_head), jnp.float32)
    r_r_bias = 0.1 * jax.random.normal(k4, (n_head, d_head), jnp.float32)
    params = make_params(kp, n_head, d_model, d_head, d_inner)

    out = decoder_layer(params, dec_inp, r, r_w_bias, r_r_bias, dec_attn_mask=None)
    out = jax.block_until_ready(out)

    assert out.shape == (qlen, bsz, d_model), out.shape
    assert bool(jnp.all(jnp.isfinite(out)))

    # loose numerics check vs. the f32 reference (kernel uses bf16 MXU inputs)
    ref = reference_decoder_layer(params, dec_inp, r, r_w_bias, r_r_bias, None)
    err = float(jnp.max(jnp.abs(out - ref)))
    assert err < 1e-1, f"max |kernel - reference| = {err}"

    print("KERNEL_OK")
</pallas_src>

<mosaic_0001>
module attributes {stable_mosaic.version = 11 : i64} {
  func.func @_rproj_kernel(%arg0: i32, %arg1: memref<8x32xf32, #tpu.memory_space<vmem>>, %arg2: memref<32x16xbf16, #tpu.memory_space<vmem>>, %arg3: memref<8x16xbf16, #tpu.memory_space<vmem>>) attributes {dimension_semantics = [#tpu.dimension_semantics<parallel>], iteration_bounds = array<i64: 1>, scalar_prefetch = 0 : i64, scratch_operands = 0 : i64, tpu.core_type = #tpu.core_type<tc>, window_params = [{transform_indices = @transform_0, window_bounds = array<i64: 8, 32>}, {pipeline_mode = #tpu.pipeline_mode<synchronous>, transform_indices = @transform_1, window_bounds = array<i64: 32, 16>}, {transform_indices = @transform_2, window_bounds = array<i64: 8, 16>}]} {
    %c0 = arith.constant 0 : index
    %c0_0 = arith.constant 0 : index
    %0 = vector.load %arg1[%c0, %c0_0] : memref<8x32xf32, #tpu.memory_space<vmem>>, vector<8x32xf32>
    %1 = arith.truncf %0 : vector<8x32xf32> to vector<8x32xbf16>
    %c0_1 = arith.constant 0 : index
    %c0_2 = arith.constant 0 : index
    %2 = vector.load %arg2[%c0_1, %c0_2] : memref<32x16xbf16, #tpu.memory_space<vmem>>, vector<32x16xbf16>
    %cst = arith.constant dense<0.000000e+00> : vector<8x16xf32>
    %3 = tpu.matmul %1, %2, %cst {dimension_numbers = #tpu.dot_dimension_numbers<[1], [0], [0], [1], [0, 0, 1, 1], [], []>} : vector<8x32xbf16>, vector<32x16xbf16>, vector<8x16xf32> -> vector<8x16xf32>
    %4 = arith.truncf %3 : vector<8x16xf32> to vector<8x16xbf16>
    %c0_3 = arith.constant 0 : index
    %c0_4 = arith.constant 0 : index
    %5 = vector.load %arg3[%c0_3, %c0_4] : memref<8x16xbf16, #tpu.memory_space<vmem>>, vector<8x16xbf16>
    tpu.vector_store %arg3[%c0_3, %c0_4], %4 {strides = array<i32>} : memref<8x16xbf16, #tpu.memory_space<vmem>>, vector<8x16xbf16>,
    return
  }
  func.func @transform_0(%arg0: i32) -> (i32, i32) {
    %c0_i32 = arith.constant 0 : i32
    %c0_i32_0 = arith.constant 0 : i32
    return %arg0, %c0_i32 : i32, i32
  }
  func.func @transform_1(%arg0: i32) -> (i32, i32) {
    %c0_i32 = arith.constant 0 : i32
    %c0_i32_0 = arith.constant 0 : i32
    %c0_i32_1 = arith.constant 0 : i32
    return %c0_i32, %c0_i32_0 : i32, i32
  }
  func.func @transform_2(%arg0: i32) -> (i32, i32) {
    %c0_i32 = arith.constant 0 : i32
    %c0_i32_0 = arith.constant 0 : i32
    return %arg0, %c0_i32 : i32, i32
  }
}

</mosaic_0001>

<llo_original>
// kernel: tpu_custom_call.1
$region0: #{tpu_custom_call.1}
  #allocation0 [shape = 'u32[]', space=smem, size = 0x4, offset = 0x4, fixed_abs, tag = 'smem constant byte address 0x4 - core index']
  #allocation1 [shape = 'u32[144,128]{1,0:T(1,128)}', space=vmem, size = 0x12000, scoped, tag = 'internal scratch']
  %s0 = inlined_call_operand.vmem [shape: f32[8,32], index: 0, kind: input, shape index: {}]
  %s1 = inlined_call_operand.vmem [shape: bf16[32,16], index: 1, kind: input, shape index: {}]
  %s2 = inlined_call_operand.hbm [shape: bf16[8,16], index: 2, kind: output, shape index: {}]
  %s3 = sld [smem:[#allocation0]]
  $region18: #{tpu_custom_call.1} parent=0
    _
  %s5 = ssub.s32 1, %s3
  %s6 = scalar_select 0, %s5, %s3
  $region1: #{tpu_custom_call.1} parent=0
    #allocation2 [shape = 'u8[2048]{0}', space=vmem, size = 0x800, scoped, tag = 'output window, operand 0, single buffered']
    #allocation3 [shape = 's32[1]{0}', space=sflag, size = 0x4, scoped, tag = 'scoped memory for tpu_custom_call.1']
    %7 = vsyncpa [#allocation3], 0
    // Predicated region
    $region2: #{tpu_custom_call.1} parent=1 // pred_check
      _
    $region3: #{tpu_custom_call.1} parent=1 // pred_check_branch
      %9 = sbr.rel (0) target = $region5
    $region4: #{tpu_custom_call.1} parent=1 // pred_region
      _
    $region5: #{tpu_custom_call.1} parent=1 // pred_fallthru
      _
    // Predicated region
    $region6: #{tpu_custom_call.1} parent=1 // pred_check
      _
    $region7: #{tpu_custom_call.1} parent=1 // pred_check_branch
      %11 = sbr.rel (0) target = $region9
    $region8: #{tpu_custom_call.1} parent=1 // pred_region
      _
    $region9: #{tpu_custom_call.1} parent=1 // pred_fallthru
      _
    %v13 = vld [vmem:[%s0] sm:$0xff]
    %v14 = vpack.c.bf16 %v13, %v13
    %v15 = vld [vmem:[%s1] sm:$0xf]
    %v16 = vld [vmem:[%s1 + $0x4] sm:$0xf]
    %v17 = vld [vmem:[%s1 + $0x8] sm:$0xf]
    %v18 = vld [vmem:[%s1 + $0xc] sm:$0xf]
    %v23 = vunpack.c.l.b16 %v15
    %v24 = vunpack.c.l.b16 %v16
    %v25 = vunpack.c.l.b16 %v17
    %v26 = vunpack.c.l.b16 %v18
    %v27 = vpack.c.b16 %v24, %v23
    %v28 = vpack.c.b16 %v26, %v25
    %vm31 = vcmask 261120
    %v33 = vsel %vm31, %v14, 0
    %35 = vmatprep.subr.bf16.mxu0 0
    %36 = vmatpush1.bf16.msra.mxu0 %v27
    %37 = vmatprep.subr.bf16.mxu0 0
    %38 = vmatpush1.bf16.msra.mxu0 %v28
    %39 = vmatprep.subr.bf16.mxu0 0
    %40 = vmatpush1.bf16.msra.mxu0 0
    %41 = vmatprep.subr.bf16.mxu0 0
    %42 = vmatpush1.bf16.msra.mxu0 0
    %43 = vmatprep.subr.bf16.mxu0 0
    %44 = vmatpush1.bf16.msra.mxu0 0
    %45 = vmatprep.subr.bf16.mxu0 0
    %46 = vmatpush1.bf16.msra.mxu0 0
    %47 = vmatprep.subr.bf16.mxu0 0
    %48 = vmatpush1.bf16.msra.mxu0 0
    %49 = vmatprep.subr.bf16.mxu0 0
    %50 = vmatpush1.bf16.msra.mxu0 0
    %51 = vmatprep.subr.bf16.mxu0 0
    %52 = vmatpush1.bf16.msra.mxu0 0
    %53 = vmatprep.subr.bf16.mxu0 0
    %54 = vmatpush1.bf16.msra.mxu0 0
    %55 = vmatprep.subr.bf16.mxu0 0
    %56 = vmatpush1.bf16.msra.mxu0 0
    %57 = vmatprep.subr.bf16.mxu0 0
    %58 = vmatpush1.bf16.msra.mxu0 0
    %59 = vmatprep.subr.bf16.mxu0 0
    %60 = vmatpush1.bf16.msra.mxu0 0
    %61 = vmatprep.subr.bf16.mxu0 0
    %62 = vmatpush1.bf16.msra.mxu0 0
    %63 = vmatprep.subr.bf16.mxu0 0
    %64 = vmatpush1.bf16.msra.mxu0 0
    %65 = vmatprep.subr.bf16.mxu0 0
    %66 = vmatpush1.bf16.msra.mxu0 0
    %67 = vmatprep.mubr.bf16.mxu0 0
    %68 = vmatmul.mubr.bf16.gmra.mrb[0].mxu0 %v33
    %v69 = vpop.f32.mrb[0].mxu0
    %v70 = vadd.f32 0.0, %v69
    %v71 = vpop.f32.mrb[0].mxu0
    %v72 = vpop.f32.mrb[0].mxu0
    %v73 = vpop.f32.mrb[0].mxu0
    %74 = vdwg.mxu0
    %v75 = vpack.c.bf16 %v70, %v70
    %vm76 = vcmask 125952
    %77 = vst.msk [vmem:[#allocation2] sm:$0xf] %vm76, %v75
    // Predicated region
    $region10: #{tpu_custom_call.1} parent=1 // pred_check
      _
    $region11: #{tpu_custom_call.1} parent=1 // pred_check_branch
      %79 = sbr.rel (0) target = $region13
    $region12: #{tpu_custom_call.1} parent=1 // pred_region
      %s81 = ssub.s32 64, 64
      %82 = vsyncadd [#allocation3], %s81
      %s84 = sshll.u32 [#allocation2], 4
      %s85 = int_to_ptr.vmem [resolvable:$true] %s84
      %87 = dma.vmem_to_hbm [thread:$0]  %s85, 64, %s2, [#allocation3]
    $region13: #{tpu_custom_call.1} parent=1 // pred_fallthru
      _
    // Predicated region
    $region14: #{tpu_custom_call.1} parent=1 // pred_check
      _
    $region15: #{tpu_custom_call.1} parent=1 // pred_check_branch
      %89 = sbr.rel (0) target = $region17
    $region16: #{tpu_custom_call.1} parent=1 // pred_region
      %90 = dma.done [#allocation3], 64
    $region17: #{tpu_custom_call.1} parent=1 // pred_fallthru
      _
    %91 = vsyncpa [#allocation3], 1

</llo_original>
